<compile_context>
chip_gen: v5e
topology: v5e:2x2
jax: 0.10.0
libtpu: 0.0.40
codegen_flags: <defaults>
</compile_context>

<pallas_src>
import functools

import jax
import jax.numpy as jnp
import numpy as np
from jax.experimental import pallas as pl
from jax.experimental.pallas import tpu as pltpu


def _round_up(x, m):
    return (x + m - 1) // m * m


def make_textcnn_kernel(tb, lout_pad, max_fs, e_pad, n_pad):
    """Fused tap-wise conv (MXU) + bias + ReLU + in-kernel mask + max-over-time + FC."""

    def kernel(x_ref, w_ref, b_ref, len_ref, fcw_ref, fcb_ref, out_ref):
        rows = tb * lout_pad
        # Tap-wise accumulating conv: conv[b, p, :] = sum_t x[b, p + t, :] @ W_t.
        # One K=E MXU matmul per tap (max_fs is small -> static unroll).
        acc = jnp.zeros((rows, n_pad), jnp.float32)
        for t in range(max_fs):
            xt = x_ref[:, t:t + lout_pad, :].reshape(rows, e_pad)
            acc = acc + jnp.dot(xt, w_ref[t], preferred_element_type=jnp.float32)

        conv = jnp.maximum(acc + b_ref[...], 0.0)                 # bias + ReLU, full vregs
        conv = conv.reshape(tb, lout_pad, n_pad)                  # lout_pad % 8 == 0 -> aligned

        # In-kernel validity mask: lane of branch i is valid at time p iff p < L - fs_i + 1.
        # Safe to zero invalid slots because ReLU outputs are >= 0.
        pos = jax.lax.broadcasted_iota(jnp.int32, (tb, lout_pad, n_pad), 1)
        conv = jnp.where(pos < len_ref[...].reshape(1, 1, n_pad), conv, 0.0)

        pooled = jnp.max(conv, axis=1)                            # sublane reduce -> [tb, n_pad]

        # Fused FC, kept in f32 (tiny matmul, pooled never rounded).
        # Dropout: identity at inference.
        out_ref[...] = (jnp.dot(pooled, fcw_ref[...], preferred_element_type=jnp.float32)
                        + fcb_ref[...])

    return kernel


@functools.partial(jax.jit, static_argnames=("n_filters", "compute_dtype", "batch_tile"))
def cnn_forward_pallas(embedded, conv_weights, conv_biases, fc_w, fc_b, n_filters,
                       compute_dtype=jnp.bfloat16, batch_tile=None):
    """embedded: [B, L, E]; conv_weights[i]: [nf, fs_i, E]; fc_w: [out, n_conv*nf]."""
    B, L, E = embedded.shape
    out_dim = fc_w.shape[0]
    filter_sizes = tuple(int(w.shape[1]) for w in conv_weights)
    n_conv = len(filter_sizes)
    max_fs = max(filter_sizes)
    min_fs = min(filter_sizes)
    nf = n_filters

    lout = L - min_fs + 1                          # union of valid conv positions
    lout_pad = _round_up(lout, 8)                  # sublane-aligned time axis
    l_need = _round_up(lout_pad + max_fs - 1, 8)   # rows needed so every tap slice is in-bounds
    e_pad = _round_up(E, 8)                        # keep E unduplicated (no im2col), 8-aligned
    n_pad = _round_up(n_conv * nf, 128)            # lane-dense conv output width
    o_pad = _round_up(out_dim, 128)                # lane-dense FC output width

    # Auto-size batch tile so rows ~= 1024 (roofline-sized), multiple of 8 for the out block.
    if batch_tile is None:
        tb = max(1, 1024 // lout_pad)
        tb = max(8, (tb // 8) * 8)
        tb = min(tb, max(8, _round_up(B, 8)))
    else:
        tb = max(8, _round_up(batch_tile, 8))
    b_pad = _round_up(B, tb)

    # ----------------- wrapper-side data prep (cast first, then pad; no im2col) -----------------
    emb = jnp.pad(embedded.astype(compute_dtype),
                  ((0, b_pad - B), (0, l_need - L), (0, e_pad - E)))          # [b_pad, l_need, e_pad]

    # Per-tap packed conv weights: W[t, e, i*nf+f] = conv_weights[i][f, t, e] (0 for t >= fs_i).
    w_pack = jnp.zeros((max_fs, e_pad, n_pad), jnp.float32)
    b_pack = jnp.zeros((1, n_pad), jnp.float32)
    for i, (w, b, fs) in enumerate(zip(conv_weights, conv_biases, filter_sizes)):
        wt = jnp.transpose(w, (1, 2, 0))                                      # [fs, E, nf]
        w_pack = w_pack.at[:fs, :E, i * nf:(i + 1) * nf].set(wt)
        b_pack = b_pack.at[0, i * nf:(i + 1) * nf].set(b)
    w_pack = w_pack.astype(compute_dtype)

    # Per-lane valid length (static constants): branch i valid at time p iff p < L - fs_i + 1.
    len_np = np.zeros((1, n_pad), np.int32)
    for i, fs in enumerate(filter_sizes):
        len_np[0, i * nf:(i + 1) * nf] = L - fs + 1
    valid_len = jnp.asarray(len_np)

    # FC weight/bias kept in f32 (tiny); padded lanes/rows are zero.
    fcw_pack = jnp.zeros((n_pad, o_pad), jnp.float32)
    fcw_pack = fcw_pack.at[:n_conv * nf, :out_dim].set(fc_w.T)
    fcb_pack = jnp.zeros((1, o_pad), jnp.float32).at[0, :out_dim].set(fc_b)

    # --------------------------------------- pallas_call ----------------------------------------
    grid = (b_pad // tb,)
    kernel = make_textcnn_kernel(tb, lout_pad, max_fs, e_pad, n_pad)

    itemsize = jnp.dtype(compute_dtype).itemsize
    flops = 2 * b_pad * lout_pad * e_pad * n_pad * max_fs + 2 * b_pad * n_pad * o_pad
    bytes_accessed = int(
        emb.size * itemsize
        + w_pack.size * itemsize
        + b_pack.size * 4
        + valid_len.size * 4
        + fcw_pack.size * 4
        + fcb_pack.size * 4
        + b_pad * o_pad * 4
    )

    out = pl.pallas_call(
        kernel,
        out_shape=jax.ShapeDtypeStruct((b_pad, o_pad), jnp.float32),
        grid=grid,
        in_specs=[
            pl.BlockSpec((tb, l_need, e_pad), lambda i: (i, 0, 0)),    # raw embeddings (per batch tile)
            pl.BlockSpec((max_fs, e_pad, n_pad), lambda i: (0, 0, 0)), # per-tap packed conv weights
            pl.BlockSpec((1, n_pad), lambda i: (0, 0)),                # packed conv bias
            pl.BlockSpec((1, n_pad), lambda i: (0, 0)),                # per-lane valid lengths (int32)
            pl.BlockSpec((n_pad, o_pad), lambda i: (0, 0)),            # packed FC weight (f32)
            pl.BlockSpec((1, o_pad), lambda i: (0, 0)),                # packed FC bias
        ],
        out_specs=pl.BlockSpec((tb, o_pad), lambda i: (i, 0)),
        compiler_params=pltpu.CompilerParams(
            dimension_semantics=("parallel",),
            # Usage here is only a few MiB; 64 MiB cap is safe on all gens
            # (v5e/v6e could go higher, v7x has 64 MiB physical per TC).
            vmem_limit_bytes=64 * 1024 * 1024,
        ),
        cost_estimate=pl.CostEstimate(
            flops=flops, transcendentals=0, bytes_accessed=bytes_accessed),
    )(emb, w_pack, b_pack, valid_len, fcw_pack, fcb_pack)

    return out[:B, :out_dim]


def cnn_forward_ref(embedded, conv_weights, conv_biases, fc_w, fc_b):
    """Pure-JAX reference mirroring the PyTorch forward (eval mode)."""
    B, L, E = embedded.shape
    pooled = []
    for W, b in zip(conv_weights, conv_biases):
        nf, fs, _ = W.shape
        lout = L - fs + 1
        conv = jnp.stack(
            [jnp.einsum('ble,fle->bf', embedded[:, t:t + fs, :], W) for t in range(lout)],
            axis=2,
        ) + b[None, :, None]
        conv = jnp.maximum(conv, 0.0)
        pooled.append(jnp.max(conv, axis=2))
    cat = jnp.concatenate(pooled, axis=1)
    return cat @ fc_w.T + fc_b


if __name__ == "__main__":
    # Small shapes consistent with the module's forward.
    vocab_size = 50
    embedding_dim = 32
    n_filters = 8
    filter_sizes = (2, 3, 4)
    output_dim = 4
    pad_idx = 0
    batch = 2
    seq_len = 8

    key = jax.random.PRNGKey(0)
    keys = jax.random.split(key, 4 + 2 * len(filter_sizes))

    emb_table = 0.1 * jax.random.normal(keys[0], (vocab_size, embedding_dim), jnp.float32)
    emb_table = emb_table.at[pad_idx].set(0.0)     # padding_idx row zero

    conv_weights, conv_biases = [], []
    for i, fs in enumerate(filter_sizes):
        conv_weights.append(
            0.1 * jax.random.normal(keys[2 + 2 * i], (n_filters, fs, embedding_dim), jnp.float32)
        )
        conv_biases.append(
            0.1 * jax.random.normal(keys[3 + 2 * i], (n_filters,), jnp.float32)
        )

    total_feats = len(filter_sizes) * n_filters
    fc_w = 0.1 * jax.random.normal(keys[1], (output_dim, total_feats), jnp.float32)
    fc_b = 0.1 * jax.random.normal(keys[-1], (output_dim,), jnp.float32)

    tokens = jax.random.randint(jax.random.PRNGKey(42), (batch, seq_len), 0, vocab_size)
    embedded = emb_table[tokens]                   # embedding gather (glue, outside kernel)

    ref = cnn_forward_ref(embedded, conv_weights, conv_biases, fc_w, fc_b)

    # f32 path — tight check.
    out_f32 = cnn_forward_pallas(embedded, conv_weights, conv_biases, fc_w, fc_b,
                                 n_filters, compute_dtype=jnp.float32)
    out_f32 = jax.block_until_ready(out_f32)
    np.testing.assert_allclose(np.asarray(out_f32), np.asarray(ref), rtol=1e-5, atol=1e-5)

    # Default bf16 operands / f32 accumulation (MXU-native on v6e/v7x) — looser tolerance.
    out_bf16 = cnn_forward_pallas(embedded, conv_weights, conv_biases, fc_w, fc_b,
                                  n_filters)
    out_bf16 = jax.block_until_ready(out_bf16)
    np.testing.assert_allclose(np.asarray(out_bf16), np.asarray(ref), rtol=5e-2, atol=5e-2)

    print("KERNEL_OK")
</pallas_src>

<mosaic_0001>
module attributes {stable_mosaic.version = 11 : i64} {
  func.func @kernel(%arg0: i32, %arg1: memref<8x16x32xf32, #tpu.memory_space<vmem>>, %arg2: memref<4x32x128xf32, #tpu.memory_space<vmem>>, %arg3: memref<1x128xf32, #tpu.memory_space<vmem>>, %arg4: memref<1x128xi32, #tpu.memory_space<vmem>>, %arg5: memref<128x128xf32, #tpu.memory_space<vmem>>, %arg6: memref<1x128xf32, #tpu.memory_space<vmem>>, %arg7: memref<8x128xf32, #tpu.memory_space<vmem>>) attributes {dimension_semantics = [#tpu.dimension_semantics<parallel>], iteration_bounds = array<i64: 1>, scalar_prefetch = 0 : i64, scratch_operands = 0 : i64, tpu.core_type = #tpu.core_type<tc>, window_params = [{transform_indices = @transform_0, window_bounds = array<i64: 8, 16, 32>}, {pipeline_mode = #tpu.pipeline_mode<synchronous>, transform_indices = @transform_1, window_bounds = array<i64: 4, 32, 128>}, {pipeline_mode = #tpu.pipeline_mode<synchronous>, transform_indices = @transform_2, window_bounds = array<i64: 1, 128>}, {pipeline_mode = #tpu.pipeline_mode<synchronous>, transform_indices = @transform_3, window_bounds = array<i64: 1, 128>}, {pipeline_mode = #tpu.pipeline_mode<synchronous>, transform_indices = @transform_4, window_bounds = array<i64: 128, 128>}, {pipeline_mode = #tpu.pipeline_mode<synchronous>, transform_indices = @transform_5, window_bounds = array<i64: 1, 128>}, {transform_indices = @transform_6, window_bounds = array<i64: 8, 128>}]} {
    %cst = arith.constant 0.000000e+00 : f32
    %0 = vector.broadcast %cst : f32 to vector<64x128xf32>
    %c0 = arith.constant 0 : index
    %c0_0 = arith.constant 0 : index
    %c0_1 = arith.constant 0 : index
    %1 = vector.load %arg1[%c0, %c0_0, %c0_1] : memref<8x16x32xf32, #tpu.memory_space<vmem>>, vector<8x8x32xf32>
    %2 = vector.shape_cast %1 : vector<8x8x32xf32> to vector<64x32xf32>
    %c0_2 = arith.constant 0 : index
    %c0_3 = arith.constant 0 : index
    %c0_4 = arith.constant 0 : index
    %3 = vector.load %arg2[%c0_2, %c0_3, %c0_4] : memref<4x32x128xf32, #tpu.memory_space<vmem>>, vector<1x32x128xf32>
    %4 = vector.shape_cast %3 : vector<1x32x128xf32> to vector<32x128xf32>
    %cst_5 = arith.constant dense<0.000000e+00> : vector<64x128xf32>
    %5 = tpu.matmul %2, %4, %cst_5 {dimension_numbers = #tpu.dot_dimension_numbers<[1], [0], [0], [1], [0, 0, 1, 1], [], []>} : vector<64x32xf32>, vector<32x128xf32>, vector<64x128xf32> -> vector<64x128xf32>
    %6 = arith.addf %0, %5 : vector<64x128xf32>
    %c0_6 = arith.constant 0 : index
    %c1 = arith.constant 1 : index
    %c0_7 = arith.constant 0 : index
    %7 = vector.load %arg1[%c0_6, %c1, %c0_7] : memref<8x16x32xf32, #tpu.memory_space<vmem>>, vector<8x8x32xf32>
    %8 = vector.shape_cast %7 : vector<8x8x32xf32> to vector<64x32xf32>
    %c1_8 = arith.constant 1 : index
    %c0_9 = arith.constant 0 : index
    %c0_10 = arith.constant 0 : index
    %9 = vector.load %arg2[%c1_8, %c0_9, %c0_10] : memref<4x32x128xf32, #tpu.memory_space<vmem>>, vector<1x32x128xf32>
    %10 = vector.shape_cast %9 : vector<1x32x128xf32> to vector<32x128xf32>
    %cst_11 = arith.constant dense<0.000000e+00> : vector<64x128xf32>
    %11 = tpu.matmul %8, %10, %cst_11 {dimension_numbers = #tpu.dot_dimension_numbers<[1], [0], [0], [1], [0, 0, 1, 1], [], []>} : vector<64x32xf32>, vector<32x128xf32>, vector<64x128xf32> -> vector<64x128xf32>
    %12 = arith.addf %6, %11 : vector<64x128xf32>
    %c0_12 = arith.constant 0 : index
    %c2 = arith.constant 2 : index
    %c0_13 = arith.constant 0 : index
    %13 = vector.load %arg1[%c0_12, %c2, %c0_13] : memref<8x16x32xf32, #tpu.memory_space<vmem>>, vector<8x8x32xf32>
    %14 = vector.shape_cast %13 : vector<8x8x32xf32> to vector<64x32xf32>
    %c2_14 = arith.constant 2 : index
    %c0_15 = arith.constant 0 : index
    %c0_16 = arith.constant 0 : index
    %15 = vector.load %arg2[%c2_14, %c0_15, %c0_16] : memref<4x32x128xf32, #tpu.memory_space<vmem>>, vector<1x32x128xf32>
    %16 = vector.shape_cast %15 : vector<1x32x128xf32> to vector<32x128xf32>
    %cst_17 = arith.constant dense<0.000000e+00> : vector<64x128xf32>
    %17 = tpu.matmul %14, %16, %cst_17 {dimension_numbers = #tpu.dot_dimension_numbers<[1], [0], [0], [1], [0, 0, 1, 1], [], []>} : vector<64x32xf32>, vector<32x128xf32>, vector<64x128xf32> -> vector<64x128xf32>
    %18 = arith.addf %12, %17 : vector<64x128xf32>
    %c0_18 = arith.constant 0 : index
    %c3 = arith.constant 3 : index
    %c0_19 = arith.constant 0 : index
    %19 = vector.load %arg1[%c0_18, %c3, %c0_19] : memref<8x16x32xf32, #tpu.memory_space<vmem>>, vector<8x8x32xf32>
    %20 = vector.shape_cast %19 : vector<8x8x32xf32> to vector<64x32xf32>
    %c3_20 = arith.constant 3 : index
    %c0_21 = arith.constant 0 : index
    %c0_22 = arith.constant 0 : index
    %21 = vector.load %arg2[%c3_20, %c0_21, %c0_22] : memref<4x32x128xf32, #tpu.memory_space<vmem>>, vector<1x32x128xf32>
    %22 = vector.shape_cast %21 : vector<1x32x128xf32> to vector<32x128xf32>
    %cst_23 = arith.constant dense<0.000000e+00> : vector<64x128xf32>
    %23 = tpu.matmul %20, %22, %cst_23 {dimension_numbers = #tpu.dot_dimension_numbers<[1], [0], [0], [1], [0, 0, 1, 1], [], []>} : vector<64x32xf32>, vector<32x128xf32>, vector<64x128xf32> -> vector<64x128xf32>
    %24 = arith.addf %18, %23 : vector<64x128xf32>
    %c0_24 = arith.constant 0 : index
    %c0_25 = arith.constant 0 : index
    %25 = vector.load %arg3[%c0_24, %c0_25] : memref<1x128xf32, #tpu.memory_space<vmem>>, vector<1x128xf32>
    %26 = vector.broadcast %25 : vector<1x128xf32> to vector<64x128xf32>
    %27 = arith.addf %24, %26 : vector<64x128xf32>
    %cst_26 = arith.constant 0.000000e+00 : f32
    %28 = vector.broadcast %cst_26 : f32 to vector<64x128xf32>
    %29 = arith.maximumf %27, %28 : vector<64x128xf32>
    %30 = vector.shape_cast %29 : vector<64x128xf32> to vector<8x8x128xf32>
    %31 = tpu.iota {dimensions = array<i32: 1>} : vector<8x8x128xi32>
    %c0_27 = arith.constant 0 : index
    %c0_28 = arith.constant 0 : index
    %32 = vector.load %arg4[%c0_27, %c0_28] : memref<1x128xi32, #tpu.memory_space<vmem>>, vector<1x128xi32>
    %33 = vector.shape_cast %32 : vector<1x128xi32> to vector<1x1x128xi32>
    %34 = vector.broadcast %33 : vector<1x1x128xi32> to vector<8x8x128xi32>
    %35 = arith.cmpi slt, %31, %34 : vector<8x8x128xi32>
    %cst_29 = arith.constant 0.000000e+00 : f32
    %36 = vector.broadcast %cst_29 : f32 to vector<8x8x128xf32>
    %37 = arith.select %35, %30, %36 : vector<8x8x128xi1>, vector<8x8x128xf32>
    %cst_30 = arith.constant dense<0xFF800000> : vector<8x128xf32>
    %38 = vector.multi_reduction <maximumf>, %37, %cst_30 [1] : vector<8x8x128xf32> to vector<8x128xf32>
    %c0_31 = arith.constant 0 : index
    %c0_32 = arith.constant 0 : index
    %39 = vector.load %arg5[%c0_31, %c0_32] : memref<128x128xf32, #tpu.memory_space<vmem>>, vector<128x128xf32>
    %cst_33 = arith.constant dense<0.000000e+00> : vector<8x128xf32>
    %40 = tpu.matmul %38, %39, %cst_33 {dimension_numbers = #tpu.dot_dimension_numbers<[1], [0], [0], [1], [0, 0, 1, 1], [], []>} : vector<8x128xf32>, vector<128x128xf32>, vector<8x128xf32> -> vector<8x128xf32>
    %c0_34 = arith.constant 0 : index
    %c0_35 = arith.constant 0 : index
    %41 = vector.load %arg6[%c0_34, %c0_35] : memref<1x128xf32, #tpu.memory_space<vmem>>, vector<1x128xf32>
    %42 = vector.broadcast %41 : vector<1x128xf32> to vector<8x128xf32>
    %43 = arith.addf %40, %42 : vector<8x128xf32>
    %c0_36 = arith.constant 0 : index
    %c0_37 = arith.constant 0 : index
    %44 = vector.load %arg7[%c0_36, %c0_37] : memref<8x128xf32, #tpu.memory_space<vmem>>, vector<8x128xf32>
    tpu.vector_store %arg7[%c0_36, %c0_37], %43 {strides = array<i32>} : memref<8x128xf32, #tpu.memory_space<vmem>>, vector<8x128xf32>,
    return
  }
  func.func @transform_0(%arg0: i32) -> (i32, i32, i32) {
    %c0_i32 = arith.constant 0 : i32
    %c0_i32_0 = arith.constant 0 : i32
    %c0_i32_1 = arith.constant 0 : i32
    return %arg0, %c0_i32, %c0_i32_0 : i32, i32, i32
  }
  func.func @transform_1(%arg0: i32) -> (i32, i32, i32) {
    %c0_i32 = arith.constant 0 : i32
    %c0_i32_0 = arith.constant 0 : i32
    %c0_i32_1 = arith.constant 0 : i32
    %c0_i32_2 = arith.constant 0 : i32
    return %c0_i32, %c0_i32_0, %c0_i32_1 : i32, i32, i32
  }
  func.func @transform_2(%arg0: i32) -> (i32, i32) {
    %c0_i32 = arith.constant 0 : i32
    %c0_i32_0 = arith.constant 0 : i32
    %c0_i32_1 = arith.constant 0 : i32
    return %c0_i32, %c0_i32_0 : i32, i32
  }
  func.func @transform_3(%arg0: i32) -> (i32, i32) {
    %c0_i32 = arith.constant 0 : i32
    %c0_i32_0 = arith.constant 0 : i32
    %c0_i32_1 = arith.constant 0 : i32
    return %c0_i32, %c0_i32_0 : i32, i32
  }
  func.func @transform_4(%arg0: i32) -> (i32, i32) {
    %c0_i32 = arith.constant 0 : i32
    %c0_i32_0 = arith.constant 0 : i32
    %c0_i32_1 = arith.constant 0 : i32
    return %c0_i32, %c0_i32_0 : i32, i32
  }
  func.func @transform_5(%arg0: i32) -> (i32, i32) {
    %c0_i32 = arith.constant 0 : i32
    %c0_i32_0 = arith.constant 0 : i32
    %c0_i32_1 = arith.constant 0 : i32
    return %c0_i32, %c0_i32_0 : i32, i32
  }
  func.func @transform_6(%arg0: i32) -> (i32, i32) {
    %c0_i32 = arith.constant 0 : i32
    %c0_i32_0 = arith.constant 0 : i32
    return %arg0, %c0_i32 : i32, i32
  }
}

</mosaic_0001>

<llo_original>
// kernel: cnn_forward_pallas.1
$region0: #{cnn_forward_pallas.1}
  #allocation0 [shape = 'u32[]', space=smem, size = 0x4, offset = 0x4, fixed_abs, tag = 'smem constant byte address 0x4 - core index']
  #allocation1 [shape = 'u32[72,128]{1,0:T(1,128)}', space=vmem, size = 0x9000, scoped, tag = 'internal scratch']
  %s0 = inlined_call_operand.vmem [shape: f32[8,16,32], index: 0, kind: input, shape index: {}]
  %s1 = inlined_call_operand.vmem [shape: f32[4,32,128], index: 1, kind: input, shape index: {}]
  %s2 = inlined_call_operand.vmem [shape: f32[1,128], index: 2, kind: input, shape index: {}]
  %s3 = inlined_call_operand.vmem [shape: s32[1,128], index: 3, kind: input, shape index: {}]
  %s4 = inlined_call_operand.vmem [shape: f32[128,128], index: 4, kind: input, shape index: {}]
  %s5 = inlined_call_operand.vmem [shape: f32[1,128], index: 5, kind: input, shape index: {}]
  %s6 = inlined_call_operand.vmem [shape: f32[8,128], index: 6, kind: output, shape index: {}]
  %s7 = sld [smem:[#allocation0]]
  $region34: #{cnn_forward_pallas.1} parent=0
    _
  %s9 = ssub.s32 1, %s7
  %s10 = scalar_select 0, %s9, %s7
  // Predicated region
  $region2: #{cnn_forward_pallas.1} parent=0 // pred_check
    _
  $region3: #{cnn_forward_pallas.1} parent=0 // pred_check_branch
    %12 = sbr.rel (0) target = $region5
  $region4: #{cnn_forward_pallas.1} parent=0 // pred_region
    _
  $region5: #{cnn_forward_pallas.1} parent=0 // pred_fallthru
    _
  // Predicated region
  $region6: #{cnn_forward_pallas.1} parent=0 // pred_check
    _
  $region7: #{cnn_forward_pallas.1} parent=0 // pred_check_branch
    %14 = sbr.rel (0) target = $region9
  $region8: #{cnn_forward_pallas.1} parent=0 // pred_region
    _
  $region9: #{cnn_forward_pallas.1} parent=0 // pred_fallthru
    _
  // Predicated region
  $region10: #{cnn_forward_pallas.1} parent=0 // pred_check
    _
  $region11: #{cnn_forward_pallas.1} parent=0 // pred_check_branch
    %16 = sbr.rel (0) target = $region13
  $region12: #{cnn_forward_pallas.1} parent=0 // pred_region
    _
  $region13: #{cnn_forward_pallas.1} parent=0 // pred_fallthru
    _
  // Predicated region
  $region14: #{cnn_forward_pallas.1} parent=0 // pred_check
    _
  $region15: #{cnn_forward_pallas.1} parent=0 // pred_check_branch
    %18 = sbr.rel (0) target = $region17
  $region16: #{cnn_forward_pallas.1} parent=0 // pred_region
    _
  $region17: #{cnn_forward_pallas.1} parent=0 // pred_fallthru
    _
  // Predicated region
  $region18: #{cnn_forward_pallas.1} parent=0 // pred_check
    _
  $region19: #{cnn_forward_pallas.1} parent=0 // pred_check_branch
    %20 = sbr.rel (0) target = $region21
  $region20: #{cnn_forward_pallas.1} parent=0 // pred_region
    _
  $region21: #{cnn_forward_pallas.1} parent=0 // pred_fallthru
    _
  // Predicated region
  $region22: #{cnn_forward_pallas.1} parent=0 // pred_check
    _
  $region23: #{cnn_forward_pallas.1} parent=0 // pred_check_branch
    %22 = sbr.rel (0) target = $region25
  $region24: #{cnn_forward_pallas.1} parent=0 // pred_region
    _
  $region25: #{cnn_forward_pallas.1} parent=0 // pred_fallthru
    _
  %v23 = vld [vmem:[%s0] sm:$0xff]
  %v24 = vld [vmem:[%s0 + $0x10] sm:$0xff]
  %v25 = vld [vmem:[%s0 + $0x20] sm:$0xff]
  %v26 = vld [vmem:[%s0 + $0x30] sm:$0xff]
  %v27 = vld [vmem:[%s0 + $0x40] sm:$0xff]
  %v28 = vld [vmem:[%s0 + $0x50] sm:$0xff]
  %v29 = vld [vmem:[%s0 + $0x60] sm:$0xff]
  %v30 = vld [vmem:[%s0 + $0x70] sm:$0xff]
  %v31 = vld [vmem:[%s1] sm:$0xff]
  %v32 = vld [vmem:[%s1 + $0x8] sm:$0xff]
  %v33 = vld [vmem:[%s1 + $0x10] sm:$0xff]
  %v34 = vld [vmem:[%s1 + $0x18] sm:$0xff]
  %v35 = vld [vmem:[%s0 + $0x1] sm:$0xff]
  %v36 = vld [vmem:[%s0 + $0x11] sm:$0xff]
  %v37 = vld [vmem:[%s0 + $0x21] sm:$0xff]
  %v38 = vld [vmem:[%s0 + $0x31] sm:$0xff]
  %v39 = vld [vmem:[%s0 + $0x41] sm:$0xff]
  %v40 = vld [vmem:[%s0 + $0x51] sm:$0xff]
  %v41 = vld [vmem:[%s0 + $0x61] sm:$0xff]
  %v42 = vld [vmem:[%s0 + $0x71] sm:$0xff]
  %s43 = scalar_lea.vmem %s1, 32
  %v44 = vld [vmem:[%s43] sm:$0xff]
  %v45 = vld [vmem:[%s43 + $0x8] sm:$0xff]
  %v46 = vld [vmem:[%s43 + $0x10] sm:$0xff]
  %v47 = vld [vmem:[%s43 + $0x18] sm:$0xff]
  %vm48 = vcmask 261120
  %v50 = vsel %vm48, %v35, 0
  %v53 = vsel %vm48, %v36, 0
  %v56 = vsel %vm48, %v37, 0
  %v59 = vsel %vm48, %v38, 0
  %v62 = vsel %vm48, %v39, 0
  %v65 = vsel %vm48, %v40, 0
  %v68 = vsel %vm48, %v41, 0
  %v71 = vsel %vm48, %v42, 0
  %73 = vmatpush.msra.mxu0 0.0
  %74 = vmatpush.msra.mxu0 0.0
  %75 = vmatpush.msra.mxu0 0.0
  %76 = vmatpush.msra.mxu0 0.0
  %77 = vmatpush.msra.mxu0 0.0
  %78 = vmatpush.msra.mxu0 0.0
  %79 = vmatpush.msra.mxu0 0.0
  %80 = vmatpush.msra.mxu0 0.0
  %81 = vmatpush.msra.mxu0 0.0
  %82 = vmatpush.msra.mxu0 0.0
  %83 = vmatpush.msra.mxu0 0.0
  %84 = vmatpush.msra.mxu0 0.0
  %85 = vmatpush.msra.mxu0 %v47
  %86 = vmatpush.msra.mxu0 %v46
  %87 = vmatpush.msra.mxu0 %v45
  %88 = vmatpush.msra.mxu0 %v44
  %89 = vmatmul.f32.gmra.mxu0 %v50
  %v90 = vpop.f32.mrf.mxu0
  %v91 = vadd.f32 0.0, %v90
  %92 = vmatmul.f32.gmra.mxu0 %v53
  %v93 = vpop.f32.mrf.mxu0
  %v94 = vadd.f32 0.0, %v93
  %95 = vmatmul.f32.gmra.mxu0 %v56
  %v96 = vpop.f32.mrf.mxu0
  %v97 = vadd.f32 0.0, %v96
  %98 = vmatmul.f32.gmra.mxu0 %v59
  %v99 = vpop.f32.mrf.mxu0
  %v100 = vadd.f32 0.0, %v99
  %101 = vmatmul.f32.gmra.mxu0 %v62
  %v102 = vpop.f32.mrf.mxu0
  %v103 = vadd.f32 0.0, %v102
  %104 = vmatmul.f32.gmra.mxu0 %v65
  %v105 = vpop.f32.mrf.mxu0
  %v106 = vadd.f32 0.0, %v105
  %107 = vmatmul.f32.gmra.mxu0 %v68
  %v108 = vpop.f32.mrf.mxu0
  %v109 = vadd.f32 0.0, %v108
  %110 = vmatmul.f32.gmra.mxu0 %v71
  %v111 = vpop.f32.mrf.mxu0
  %v112 = vadd.f32 0.0, %v111
  %113 = vdwg.mxu0
  %v115 = vsel %vm48, %v23, 0
  %v118 = vsel %vm48, %v24, 0
  %v121 = vsel %vm48, %v25, 0
  %v124 = vsel %vm48, %v26, 0
  %v127 = vsel %vm48, %v27, 0
  %v130 = vsel %vm48, %v28, 0
  %v133 = vsel %vm48, %v29, 0
  %v136 = vsel %vm48, %v30, 0
  %138 = vmatpush.msra.mxu0 0.0
  %139 = vmatpush.msra.mxu0 0.0
  %140 = vmatpush.msra.mxu0 0.0
  %141 = vmatpush.msra.mxu0 0.0
  %142 = vmatpush.msra.mxu0 0.0
  %143 = vmatpush.msra.mxu0 0.0
  %144 = vmatpush.msra.mxu0 0.0
  %145 = vmatpush.msra.mxu0 0.0
  %146 = vmatpush.msra.mxu0 0.0
  %147 = vmatpush.msra.mxu0 0.0
  %148 = vmatpush.msra.mxu0 0.0
  %149 = vmatpush.msra.mxu0 0.0
  %150 = vmatpush.msra.mxu0 %v34
  %151 = vmatpush.msra.mxu0 %v33
  %152 = vmatpush.msra.mxu0 %v32
  %153 = vmatpush.msra.mxu0 %v31
  %154 = vmatmul.f32.gmra.mxu0 %v115
  %v155 = vpop.f32.mrf.mxu0
  %v156 = vadd.f32 %v91, %v155
  %157 = vmatmul.f32.gmra.mxu0 %v118
  %v158 = vpop.f32.mrf.mxu0
  %v159 = vadd.f32 %v94, %v158
  %160 = vmatmul.f32.gmra.mxu0 %v121
  %v161 = vpop.f32.mrf.mxu0
  %v162 = vadd.f32 %v97, %v161
  %163 = vmatmul.f32.gmra.mxu0 %v124
  %v164 = vpop.f32.mrf.mxu0
  %v165 = vadd.f32 %v100, %v164
  %166 = vmatmul.f32.gmra.mxu0 %v127
  %v167 = vpop.f32.mrf.mxu0
  %v168 = vadd.f32 %v103, %v167
  %169 = vmatmul.f32.gmra.mxu0 %v130
  %v170 = vpop.f32.mrf.mxu0
  %v171 = vadd.f32 %v106, %v170
  %172 = vmatmul.f32.gmra.mxu0 %v133
  %v173 = vpop.f32.mrf.mxu0
  %v174 = vadd.f32 %v109, %v173
  %175 = vmatmul.f32.gmra.mxu0 %v136
  %v176 = vpop.f32.mrf.mxu0
  %v177 = vadd.f32 %v112, %v176
  %178 = vdwg.mxu0
  %v179 = vld [vmem:[%s0 + $0x2] sm:$0xff]
  %v180 = vld [vmem:[%s0 + $0x12] sm:$0xff]
  %v181 = vld [vmem:[%s0 + $0x22] sm:$0xff]
  %v182 = vld [vmem:[%s0 + $0x32] sm:$0xff]
  %v183 = vld [vmem:[%s0 + $0x42] sm:$0xff]
  %v184 = vld [vmem:[%s0 + $0x52] sm:$0xff]
  %v185 = vld [vmem:[%s0 + $0x62] sm:$0xff]
  %v186 = vld [vmem:[%s0 + $0x72] sm:$0xff]
  %s187 = scalar_lea.vmem %s1, 64
  %v188 = vld [vmem:[%s187] sm:$0xff]
  %v189 = vld [vmem:[%s187 + $0x8] sm:$0xff]
  %v190 = vld [vmem:[%s187 + $0x10] sm:$0xff]
  %v191 = vld [vmem:[%s187 + $0x18] sm:$0xff]
  %v193 = vsel %vm48, %v179, 0
  %v196 = vsel %vm48, %v180, 0
  %v199 = vsel %vm48, %v181, 0
  %v202 = vsel %vm48, %v182, 0
  %v205 = vsel %vm48, %v183, 0
  %v208 = vsel %vm48, %v184, 0
  %v211 = vsel %vm48, %v185, 0
  %v214 = vsel %vm48, %v186, 0
  %216 = vmatpush.msra.mxu0 0.0
  %217 = vmatpush.msra.mxu0 0.0
  %218 = vmatpush.msra.mxu0 0.0
  %219 = vmatpush.msra.mxu0 0.0
  %220 = vmatpush.msra.mxu0 0.0
  %221 = vmatpush.msra.mxu0 0.0
  %222 = vmatpush.msra.mxu0 0.0
  %223 = vmatpush.msra.mxu0 0.0
  %224 = vmatpush.msra.mxu0 0.0
  %225 = vmatpush.msra.mxu0 0.0
  %226 = vmatpush.msra.mxu0 0.0
  %227 = vmatpush.msra.mxu0 0.0
  %228 = vmatpush.msra.mxu0 %v191
  %229 = vmatpush.msra.mxu0 %v190
  %230 = vmatpush.msra.mxu0 %v189
  %231 = vmatpush.msra.mxu0 %v188
  %232 = vmatmul.f32.gmra.mxu0 %v193
  %v233 = vpop.f32.mrf.mxu0
  %v234 = vadd.f32 0.0, %v233
  %235 = vmatmul.f32.gmra.mxu0 %v196
  %v236 = vpop.f32.mrf.mxu0
  %v237 = vadd.f32 0.0, %v236
  %238 = vmatmul.f32.gmra.mxu0 %v199
  %v239 = vpop.f32.mrf.mxu0
  %v240 = vadd.f32 0.0, %v239
  %241 = vmatmul.f32.gmra.mxu0 %v202
  %v242 = vpop.f32.mrf.mxu0
  %v243 = vadd.f32 0.0, %v242
  %244 = vmatmul.f32.gmra.mxu0 %v205
  %v245 = vpop.f32.mrf.mxu0
  %v246 = vadd.f32 0.0, %v245
  %247 = vmatmul.f32.gmra.mxu0 %v208
  %v248 = vpop.f32.mrf.mxu0
  %v249 = vadd.f32 0.0, %v248
  %250 = vmatmul.f32.gmra.mxu0 %v211
  %v251 = vpop.f32.mrf.mxu0
  %v252 = vadd.f32 0.0, %v251
  %253 = vmatmul.f32.gmra.mxu0 %v214
  %v254 = vpop.f32.mrf.mxu0
  %v255 = vadd.f32 0.0, %v254
  %256 = vdwg.mxu0
  %v257 = vadd.f32 %v156, %v234
  %v258 = vadd.f32 %v159, %v237
  %v259 = vadd.f32 %v162, %v240
  %v260 = vadd.f32 %v165, %v243
  %v261 = vadd.f32 %v168, %v246
  %v262 = vadd.f32 %v171, %v249
  %v263 = vadd.f32 %v174, %v252
  %v264 = vadd.f32 %v177, %v255
  %v265 = vld [vmem:[%s0 + $0x3] sm:$0xff]
  %v266 = vld [vmem:[%s0 + $0x13] sm:$0xff]
  %v267 = vld [vmem:[%s0 + $0x23] sm:$0xff]
  %v268 = vld [vmem:[%s0 + $0x33] sm:$0xff]
  %v269 = vld [vmem:[%s0 + $0x43] sm:$0xff]
  %v270 = vld [vmem:[%s0 + $0x53] sm:$0xff]
  %v271 = vld [vmem:[%s0 + $0x63] sm:$0xff]
  %v272 = vld [vmem:[%s0 + $0x73] sm:$0xff]
  %s273 = scalar_lea.vmem %s1, 96
  %v274 = vld [vmem:[%s273] sm:$0xff]
  %v275 = vld [vmem:[%s273 + $0x8] sm:$0xff]
  %v276 = vld [vmem:[%s273 + $0x10] sm:$0xff]
  %v277 = vld [vmem:[%s273 + $0x18] sm:$0xff]
  %v279 = vsel %vm48, %v265, 0
  %v282 = vsel %vm48, %v266, 0
  %v285 = vsel %vm48, %v267, 0
  %v288 = vsel %vm48, %v268, 0
  %v291 = vsel %vm48, %v269, 0
  %v294 = vsel %vm48, %v270, 0
  %v297 = vsel %vm48, %v271, 0
  %v300 = vsel %vm48, %v272, 0
  %302 = vmatpush.msra.mxu0 0.0
  %303 = vmatpush.msra.mxu0 0.0
  %304 = vmatpush.msra.mxu0 0.0
  %305 = vmatpush.msra.mxu0 0.0
  %306 = vmatpush.msra.mxu0 0.0
  %307 = vmatpush.msra.mxu0 0.0
  %308 = vmatpush.msra.mxu0 0.0
  %309 = vmatpush.msra.mxu0 0.0
  %310 = vmatpush.msra.mxu0 0.0
  %311 = vmatpush.msra.mxu0 0.0
  %312 = vmatpush.msra.mxu0 0.0
  %313 = vmatpush.msra.mxu0 0.0
  %314 = vmatpush.msra.mxu0 %v277
  %315 = vmatpush.msra.mxu0 %v276
  %316 = vmatpush.msra.mxu0 %v275
  %317 = vmatpush.msra.mxu0 %v274
  %318 = vmatmul.f32.gmra.mxu0 %v279
  %v319 = vpop.f32.mrf.mxu0
  %v320 = vadd.f32 0.0, %v319
  %321 = vmatmul.f32.gmra.mxu0 %v282
  %v322 = vpop.f32.mrf.mxu0
  %v323 = vadd.f32 0.0, %v322
  %324 = vmatmul.f32.gmra.mxu0 %v285
  %v325 = vpop.f32.mrf.mxu0
  %v326 = vadd.f32 0.0, %v325
  %327 = vmatmul.f32.gmra.mxu0 %v288
  %v328 = vpop.f32.mrf.mxu0
  %v329 = vadd.f32 0.0, %v328
  %330 = vmatmul.f32.gmra.mxu0 %v291
  %v331 = vpop.f32.mrf.mxu0
  %v332 = vadd.f32 0.0, %v331
  %333 = vmatmul.f32.gmra.mxu0 %v294
  %v334 = vpop.f32.mrf.mxu0
  %v335 = vadd.f32 0.0, %v334
  %336 = vmatmul.f32.gmra.mxu0 %v297
  %v337 = vpop.f32.mrf.mxu0
  %v338 = vadd.f32 0.0, %v337
  %339 = vmatmul.f32.gmra.mxu0 %v300
  %v340 = vpop.f32.mrf.mxu0
  %v341 = vadd.f32 0.0, %v340
  %342 = vdwg.mxu0
  %v343 = vadd.f32 %v257, %v320
  %v344 = vadd.f32 %v258, %v323
  %v345 = vadd.f32 %v259, %v326
  %v346 = vadd.f32 %v260, %v329
  %v347 = vadd.f32 %v261, %v332
  %v348 = vadd.f32 %v262, %v335
  %v349 = vadd.f32 %v263, %v338
  %v350 = vadd.f32 %v264, %v341
  %v351 = vld [vmem:[%s2] sm:$0x1]
  %v353 = vperm.slane %v351, 0
  %v355 = vadd.f32 %v343, %v353
  %v356 = vadd.f32 %v344, %v353
  %v357 = vadd.f32 %v345, %v353
  %v358 = vadd.f32 %v346, %v353
  %v359 = vadd.f32 %v347, %v353
  %v360 = vadd.f32 %v348, %v353
  %v361 = vadd.f32 %v349, %v353
  %v362 = vadd.f32 %v350, %v353
  %v363 = vmax.f32 %v355, 0.0
  %v364 = vmax.f32 %v356, 0.0
  %v365 = vmax.f32 %v357, 0.0
  %v366 = vmax.f32 %v358, 0.0
  %v367 = vmax.f32 %v359, 0.0
  %v368 = vmax.f32 %v360, 0.0
  %v369 = vmax.f32 %v361, 0.0
  %v370 = vmax.f32 %v362, 0.0
  %v371 = vlaneseq
  %v372 = vshrl.u32 %v371, 7
  %v373 = vld [vmem:[%s3] sm:$0x1]
  %v374 = vperm.slane %v373, 0
  %vm375 = vcmp.lt.s32.totalorder %v372, %v374
  %v376 = vsel %vm375, %v363, 0.0
  %v377 = vsel %vm375, %v364, 0.0
  %v378 = vsel %vm375, %v365, 0.0
  %v379 = vsel %vm375, %v366, 0.0
  %v380 = vsel %vm375, %v367, 0.0
  %v381 = vsel %vm375, %v368, 0.0
  %v382 = vsel %vm375, %v369, 0.0
  %v383 = vsel %vm375, %v370, 0.0
  %v384 = vrot.slane %v376, 4
  %v385 = vmax.f32 %v376, %v384
  %v386 = vrot.slane %v385, 2
  %v387 = vmax.f32 %v385, %v386
  %v388 = vrot.slane %v387, 1
  %v389 = vmax.f32 %v387, %v388
  %v390 = vrot.slane %v377, 4
  %v391 = vmax.f32 %v377, %v390
  %v392 = vrot.slane %v391, 2
  %v393 = vmax.f32 %v391, %v392
  %v394 = vrot.slane %v393, 1
  %v395 = vmax.f32 %v393, %v394
  %v396 = vrot.slane %v378, 4
  %v397 = vmax.f32 %v378, %v396
  %v398 = vrot.slane %v397, 2
  %v399 = vmax.f32 %v397, %v398
  %v400 = vrot.slane %v399, 1
  %v401 = vmax.f32 %v399, %v400
  %v402 = vrot.slane %v379, 4
  %v403 = vmax.f32 %v379, %v402
  %v404 = vrot.slane %v403, 2
  %v405 = vmax.f32 %v403, %v404
  %v406 = vrot.slane %v405, 1
  %v407 = vmax.f32 %v405, %v406
  %v408 = vrot.slane %v380, 4
  %v409 = vmax.f32 %v380, %v408
  %v410 = vrot.slane %v409, 2
  %v411 = vmax.f32 %v409, %v410
  %v412 = vrot.slane %v411, 1
  %v413 = vmax.f32 %v411, %v412
  %v414 = vrot.slane %v381, 4
  %v415 = vmax.f32 %v381, %v414
  %v416 = vrot.slane %v415, 2
  %v417 = vmax.f32 %v415, %v416
  %v418 = vrot.slane %v417, 1
  %v419 = vmax.f32 %v417, %v418
  %v420 = vrot.slane %v382, 4
  %v421 = vmax.f32 %v382, %v420
  %v422 = vrot.slane %v421, 2
  %v423 = vmax.f32 %v421, %v422
  %v424 = vrot.slane %v423, 1
  %v425 = vmax.f32 %v423, %v424
  %v426 = vrot.slane %v383, 4
  %v427 = vmax.f32 %v383, %v426
  %v428 = vrot.slane %v427, 2
  %v429 = vmax.f32 %v427, %v428
  %v430 = vrot.slane %v429, 1
  %v431 = vmax.f32 %v429, %v430
  %v432 = vld [vmem:[%s4] sm:$0xff]
  %v433 = vld [vmem:[%s4 + $0x8] sm:$0xff]
  %v434 = vld [vmem:[%s4 + $0x10] sm:$0xff]
  %v435 = vld [vmem:[%s4 + $0x18] sm:$0xff]
  %v436 = vld [vmem:[%s4 + $0x20] sm:$0xff]
  %v437 = vld [vmem:[%s4 + $0x28] sm:$0xff]
  %v438 = vld [vmem:[%s4 + $0x30] sm:$0xff]
  %v439 = vld [vmem:[%s4 + $0x38] sm:$0xff]
  %v440 = vld [vmem:[%s4 + $0x40] sm:$0xff]
  %v441 = vld [vmem:[%s4 + $0x48] sm:$0xff]
  %v442 = vld [vmem:[%s4 + $0x50] sm:$0xff]
  %v443 = vld [vmem:[%s4 + $0x58] sm:$0xff]
  %v444 = vld [vmem:[%s4 + $0x60] sm:$0xff]
  %v445 = vld [vmem:[%s4 + $0x68] sm:$0xff]
  %v446 = vld [vmem:[%s4 + $0x70] sm:$0xff]
  %v447 = vld [vmem:[%s4 + $0x78] sm:$0xff]
  %v448 = vld [vmem:[%s5] sm:$0x1]
  %v450 = vperm.slane %v448, 0
  %vm460 = vcmask 1041409
  %v461 = vsel %vm460, %v395, %v389
  %vm462 = vcmask 1042434
  %v463 = vsel %vm462, %v401, %v461
  %vm464 = vcmask 1043459
  %v465 = vsel %vm464, %v407, %v463
  %vm466 = vcmask 1044484
  %v467 = vsel %vm466, %v413, %v465
  %vm468 = vcmask 1045509
  %v469 = vsel %vm468, %v419, %v467
  %vm470 = vcmask 1046534
  %v471 = vsel %vm470, %v425, %v469
  %vm472 = vcmask 1047559
  %v473 = vsel %vm472, %v431, %v471
  %475 = vmatpush.msra.mxu0 %v447
  %476 = vmatpush.msra.mxu0 %v446
  %477 = vmatpush.msra.mxu0 %v445
  %478 = vmatpush.msra.mxu0 %v444
  %479 = vmatpush.msra.mxu0 %v443
  %480 = vmatpush.msra.mxu0 %v442
  %481 = vmatpush.msra.mxu0 %v441
  %482 = vmatpush.msra.mxu0 %v440
  %483 = vmatpush.msra.mxu0 %v439
  %484 = vmatpush.msra.mxu0 %v438
  %485 = vmatpush.msra.mxu0 %v437
  %486 = vmatpush.msra.mxu0 %v436
  %487 = vmatpush.msra.mxu0 %v435
  %488 = vmatpush.msra.mxu0 %v434
  %489 = vmatpush.msra.mxu0 %v433
  %490 = vmatpush.msra.mxu0 %v432
  %491 = vmatmul.f32.gmra.mxu0 %v473
  %v492 = vpop.f32.mrf.mxu0
  %v493 = vadd.f32 %v450, %v492
  %494 = vdwg.mxu0
  %495 = vst [vmem:[%s6] sm:$0xff] %v493
  // Predicated region
  $region26: #{cnn_forward_pallas.1} parent=0 // pred_check
    _
  $region27: #{cnn_forward_pallas.1} parent=0 // pred_check_branch
    %497 = sbr.rel (0) target = $region29
  $region28: #{cnn_forward_pallas.1} parent=0 // pred_region
    _
  $region29: #{cnn_forward_pallas.1} parent=0 // pred_fallthru
    _
  // Predicated region
  $region30: #{cnn_forward_pallas.1} parent=0 // pred_check
    _
  $region31: #{cnn_forward_pallas.1} parent=0 // pred_check_branch
    %499 = sbr.rel (0) target = $region33
  $region32: #{cnn_forward_pallas.1} parent=0 // pred_region
    _
  $region33: #{cnn_forward_pallas.1} parent=0 // pred_fallthru
    _

</llo_original>
